<compile_context>
chip_gen: v7x
topology: tpu7x:2x2x1
jax: 0.10.0
libtpu: 0.0.40
codegen_flags: <defaults>
</compile_context>

<pallas_src>
import jax
import jax.numpy as jnp
from jax.experimental import pallas as pl
from jax.experimental.pallas import tpu as pltpu


def _dma_copy_kernel(x_hbm, o_hbm):
    # Single whole-array HBM->HBM DMA; no VMEM staging, no grid.
    def body(sem):
        cp = pltpu.make_async_copy(x_hbm, o_hbm, sem)
        cp.start()
        cp.wait()

    pl.run_scoped(body, pltpu.SemaphoreType.DMA)


def _pallas_identity_copy(x):
    """Identity-copy `x` via one HBM->HBM DMA inside a Pallas kernel."""
    nbytes = x.size * jnp.dtype(x.dtype).itemsize
    return pl.pallas_call(
        _dma_copy_kernel,
        out_shape=jax.ShapeDtypeStruct(x.shape, x.dtype),
        in_specs=[pl.BlockSpec(memory_space=pl.ANY)],
        out_specs=pl.BlockSpec(memory_space=pl.ANY),
        cost_estimate=pl.CostEstimate(
            flops=0, transcendentals=0, bytes_accessed=2 * nbytes
        ),
    )(x)


class ReshapeWrapper:
    """JAX/Pallas equivalent of the PyTorch ReshapeWrapper module."""

    def __init__(self, shape):
        self.shape = tuple(shape)

    def __call__(self, x):
        if x.size == 0:
            # Degenerate empty tensor: nothing to DMA, reshape is pure metadata.
            return jnp.reshape(x, self.shape)
        y = _pallas_identity_copy(x)
        # Metadata-only reshape to the requested target shape (supports -1
        # inference just like torch.reshape).
        return jnp.reshape(y, self.shape)


if __name__ == "__main__":
    key = jax.random.PRNGKey(0)
    # Small NCHW-ish input consistent with typical fuzzer usage.
    x = jax.random.normal(key, (2, 4, 16, 16), dtype=jnp.float32)

    # Target shape: same number of elements (2*4*16*16 = 2048).
    target_shape = (2, 64, 16)
    mod = ReshapeWrapper(target_shape)

    fwd = jax.jit(mod.__call__)
    y = fwd(x)
    jax.block_until_ready(y)

    # Correctness check against plain jnp.reshape (== torch.reshape semantics
    # for contiguous inputs: identical row-major element order).
    ref = jnp.reshape(x, target_shape)
    assert y.shape == tuple(target_shape), (y.shape, target_shape)
    assert y.dtype == x.dtype
    assert bool(jnp.array_equal(y, ref))

    print("KERNEL_OK")
</pallas_src>

<mosaic_0001>
module attributes {stable_mosaic.version = 11 : i64} {
  func.func @_dma_copy_kernel(%arg0: memref<2x4x16x16xf32, #tpu.memory_space<any>>, %arg1: memref<2x4x16x16xf32, #tpu.memory_space<any>>) attributes {dimension_semantics = [], scalar_prefetch = 0 : i64, scratch_operands = 0 : i64, tpu.core_type = #tpu.core_type<tc>} {
    "tpu.region"() ({
      %0 = tpu.sem_alloc : memref<!tpu.dma_semaphore, #tpu.memory_space<semaphore_mem>>
      tpu.enqueue_dma source(%arg0 : memref<2x4x16x16xf32, #tpu.memory_space<any>>) target(%arg1 : memref<2x4x16x16xf32, #tpu.memory_space<any>>) target_semaphore(%0 : memref<!tpu.dma_semaphore, #tpu.memory_space<semaphore_mem>>)
      tpu.wait_dma2 semaphore(%0 : memref<!tpu.dma_semaphore, #tpu.memory_space<semaphore_mem>>) src(%arg0 : memref<2x4x16x16xf32, #tpu.memory_space<any>>) dst(%arg1 : memref<2x4x16x16xf32, #tpu.memory_space<any>>)
      tpu.yield
    }) : () -> ()
    return
  }
}

</mosaic_0001>

<llo_original>
// kernel: a_call__.1
$region0: #{a_call__.1}
  #allocation0 [shape = 'u32[]', space=smem, size = 0x4, offset = 0x4, fixed_abs, tag = 'smem constant byte address 0x4 - core index']
  #allocation1 [shape = 'u32[144,128]{1,0:T(1,128)}', space=vmem, size = 0x12000, scoped, tag = 'internal scratch']
  #allocation3 [shape = 's32[]', space=sflag, size = 0x4, offset = 0, fixed_abs, tag = 'sflag constant byte address 0x0 - dummy sync flag']
  #allocation4 [shape = 's32[]', space=sflag, size = 0x4, offset = 0, fixed_abs, tag = 'sflag constant byte address 0x0 - dummy sync flag']
  #allocation5 [shape = 'u32[]', space=smem, size = 0x4, offset = 0x44, fixed_abs, tag = 'smem constant byte address 0x44 - assertion arg 0']
  #allocation6 [shape = 'u32[]', space=smem, size = 0x4, offset = 0x48, fixed_abs, tag = 'smem constant byte address 0x48 - assertion arg 1']
  %s0 = inlined_call_operand.hbm [shape: f32[2,4,16,16], index: 0, kind: input, shape index: {}]
  %s1 = inlined_call_operand.vmem [shape: f32[2,4,16,16], index: 1, kind: output, shape index: {}]
  %s2 = sld [smem:[#allocation0]]
  $region7: #{a_call__.1} parent=0
    _
  %s4 = ssub.s32 1, %s2
  %s5 = scalar_select 0, %s4, %s2
  $region2: #{a_call__.1} parent=0
    #allocation2 [shape = 's32[1]{0}', space=sflag, size = 0x4, scoped, tag = 'scoped memory for a_call__.1']
    // Predicated region
    $region3: #{a_call__.1} parent=2 // pred_check
      _
    $region4: #{a_call__.1} parent=2 // pred_check_branch
      %7 = sbr.rel target = $region6
    $region5: #{a_call__.1} parent=2 // pred_region
      %8 = sst [smem:[#allocation5]] [#allocation4]
      %9 = sst [smem:[#allocation6]] [#allocation3]
    $region6: #{a_call__.1} parent=2 // pred_fallthru
      _
    %11 = shalt.err (0)
    %s13 = sshll.u32 %s1, 4
    %s14 = int_to_ptr.vmem [resolvable:$true] %s13
    %16 = dma.hbm_to_vmem [thread:$0]  %s0, 2048, %s14, [#allocation2]
    %s17 = smul.u32 2, 4
    %s18 = smul.u32 %s17, 16
    %s19 = smul.u32 %s18, 1
    %s20 = sshll.u32 %s19, 4
    %21 = dma.done [#allocation2], %s20

</llo_original>
